<compile_context>
chip_gen: v7x
topology: tpu7x:2x2x1
jax: 0.10.0
libtpu: 0.0.40
codegen_flags: <defaults>
</compile_context>

<pallas_src>
import functools

import jax
import jax.numpy as jnp
from jax import lax
from jax.experimental import pallas as pl
from jax.experimental.pallas import tpu as pltpu


def _round_up(x: int, k: int) -> int:
    return ((x + k - 1) // k) * k


def _asl_kernel(preds_ref, gts_ref, out_ref, acc_sum_ref, acc_cnt_ref, *,
                n_batch, ignore_index, alpha, ce_weight, focal_weight):
    i = pl.program_id(0)

    @pl.when(i == 0)
    def _init():
        acc_sum_ref[...] = jnp.zeros_like(acc_sum_ref)
        acc_cnt_ref[...] = jnp.zeros_like(acc_cnt_ref)

    x = preds_ref[...].astype(jnp.float32)          # (C, TILE)  classes on sublanes
    gt = gts_ref[...]                               # (1, TILE)  int32

    valid = gt != ignore_index                      # (1, TILE)

    # Numerically stable logsumexp over the class (sublane) axis.
    m = jnp.max(x, axis=0, keepdims=True)                                  # (1, TILE)
    lse = m + jnp.log(jnp.sum(jnp.exp(x - m), axis=0, keepdims=True))      # (1, TILE)

    # Gather the target logit with a one-hot mask along the class axis.
    # Ignored positions (gt == 255 >= C) never match -> tgt = 0, and they are
    # masked out of the accumulation anyway.
    cls_iota = lax.broadcasted_iota(jnp.int32, x.shape, 0)                 # (C, TILE)
    tgt = jnp.sum(jnp.where(cls_iota == gt, x, 0.0), axis=0, keepdims=True)

    per_pos = lse - tgt                              # -log_softmax(x)[target]
    acc_sum_ref[...] += jnp.where(valid, per_pos, 0.0)
    acc_cnt_ref[...] += valid.astype(jnp.float32)

    @pl.when(i == pl.num_programs(0) - 1)
    def _finalize():
        total = jnp.sum(acc_sum_ref[...], keepdims=True)   # (1, 1)
        cnt = jnp.sum(acc_cnt_ref[...], keepdims=True)     # (1, 1)
        ce = total / cnt                                   # mean CE over valid positions

        # FocalLoss(gamma=2.0, alpha=0.25, batch_average=True) applied to the scalar CE
        # (this is exactly what the reference FocalLoss does).
        logpt = -ce
        pt = jnp.exp(logpt)
        one_minus = 1.0 - pt
        focal = -(one_minus * one_minus) * (alpha * logpt) / n_batch  # gamma == 2.0

        out_ref[...] = ce_weight * ce + focal_weight * focal


def action_segmentation_loss(preds, gts, sim_index=None, *,
                             ignore_index=255, ce_weight=1.0, focal_weight=1.0,
                             alpha=0.25, gamma=2.0, tile_m=2048):
    """Pallas implementation of ActionSegmentationLoss.forward (ce=True, focal=True)."""
    del sim_index  # only used by the (disabled by default) GaussianSimilarityTMSE branch
    assert gamma == 2.0, "FocalLoss gamma is fixed to 2.0 in the reference module"
    n, c, t = preds.shape
    m = n * t

    # Lane-dense layout: [C, N*T] -- classes on sublanes, positions on lanes.
    x = jnp.transpose(preds, (1, 0, 2)).reshape(c, m)
    g = gts.reshape(1, m).astype(jnp.int32)

    # Tile of positions: multiple of 128 lanes; pad the position axis to a whole
    # number of tiles (padded positions carry ignore_index -> masked out).
    tile = min(tile_m, _round_up(m, 128))
    m_pad = _round_up(m, tile)
    if m_pad != m:
        x = jnp.pad(x, ((0, 0), (0, m_pad - m)))
        g = jnp.pad(g, ((0, 0), (0, m_pad - m)), constant_values=ignore_index)

    grid = (m_pad // tile,)
    kernel = functools.partial(
        _asl_kernel,
        n_batch=float(n),
        ignore_index=ignore_index,
        alpha=alpha,
        ce_weight=ce_weight,
        focal_weight=focal_weight,
    )

    out = pl.pallas_call(
        kernel,
        out_shape=jax.ShapeDtypeStruct((1, 1), jnp.float32),
        grid_spec=pltpu.PrefetchScalarGridSpec(
            num_scalar_prefetch=0,
            grid=grid,
            in_specs=[
                pl.BlockSpec((c, tile), lambda i: (0, i)),   # preds tile, streamed
                pl.BlockSpec((1, tile), lambda i: (0, i)),   # labels tile, streamed
            ],
            out_specs=pl.BlockSpec((1, 1), lambda i: (0, 0)),  # scalar, resident
            scratch_shapes=[
                pltpu.VMEM((1, tile), jnp.float32),   # running sum of per-position CE
                pltpu.VMEM((1, tile), jnp.float32),   # running count of valid positions
            ],
        ),
        compiler_params=pltpu.CompilerParams(
            dimension_semantics=("arbitrary",),        # reduction axis
            vmem_limit_bytes=32 * 1024 * 1024,         # safe on v5e/v6e (128 MiB) and v7x (64 MiB)
        ),
    )(x, g)
    return out[0, 0]


def _reference(preds, gts, *, ignore_index=255, alpha=0.25, gamma=2.0,
               ce_weight=1.0, focal_weight=1.0):
    """Pure-JAX reference mirroring CrossEntropyLoss + FocalLoss."""
    n, _, _ = preds.shape
    logp = jax.nn.log_softmax(preds.astype(jnp.float32), axis=1)       # (N, C, T)
    valid = gts != ignore_index
    gts_safe = jnp.where(valid, gts, 0)
    tgt_logp = jnp.take_along_axis(logp, gts_safe[:, None, :], axis=1)[:, 0, :]  # (N, T)
    ce = jnp.sum(jnp.where(valid, -tgt_logp, 0.0)) / jnp.sum(valid).astype(jnp.float32)
    logpt = -ce
    pt = jnp.exp(logpt)
    focal = -((1.0 - pt) ** gamma) * (alpha * logpt) / n
    return ce_weight * ce + focal_weight * focal


if __name__ == "__main__":
    key = jax.random.PRNGKey(0)
    k1, k2, k3, k4 = jax.random.split(key, 4)

    # Small shapes consistent with (N, C, T) preds and (N, T) labels.
    N, C, T = 2, 32, 64
    preds = jax.random.normal(k1, (N, C, T), dtype=jnp.float32)
    gts = jax.random.randint(k2, (N, T), 0, C, dtype=jnp.int32)
    # Sprinkle some ignore_index positions to exercise masking.
    ignore_mask = jax.random.bernoulli(k3, 0.1, (N, T))
    gts = jnp.where(ignore_mask, 255, gts)
    sim_index = jax.random.normal(k4, (N, 16, T), dtype=jnp.float32)  # unused (gstmse=False)

    loss = jax.block_until_ready(action_segmentation_loss(preds, gts, sim_index))
    ref = jax.block_until_ready(_reference(preds, gts))

    assert jnp.allclose(loss, ref, rtol=1e-4, atol=1e-5), (loss, ref)
    print("KERNEL_OK")
</pallas_src>

<mosaic_0001>
module attributes {stable_mosaic.version = 11 : i64} {
  func.func @_asl_kernel(%arg0: i32, %arg1: memref<32x128xf32, #tpu.memory_space<vmem>>, %arg2: memref<1x128xi32, #tpu.memory_space<vmem>>, %arg3: memref<1x1xf32, #tpu.memory_space<vmem>>, %arg4: memref<1x128xf32, #tpu.memory_space<vmem>>, %arg5: memref<1x128xf32, #tpu.memory_space<vmem>>) attributes {dimension_semantics = [#tpu.dimension_semantics<arbitrary>], iteration_bounds = array<i64: 1>, scalar_prefetch = 0 : i64, scratch_operands = 2 : i64, tpu.core_type = #tpu.core_type<tc>, window_params = [{transform_indices = @transform_0, window_bounds = array<i64: 32, 128>}, {transform_indices = @transform_1, window_bounds = array<i64: 1, 128>}, {pipeline_mode = #tpu.pipeline_mode<synchronous>, transform_indices = @transform_2, window_bounds = array<i64: 1, 1>}]} {
    %c0_i32 = arith.constant 0 : i32
    %0 = arith.cmpi eq, %arg0, %c0_i32 : i32
    %1 = arith.extui %0 : i1 to i32
    %c0_i32_0 = arith.constant 0 : i32
    %2 = arith.cmpi ne, %1, %c0_i32_0 : i32
    scf.if %2 {
      %cst_18 = arith.constant 0.000000e+00 : f32
      %37 = vector.broadcast %cst_18 : f32 to vector<1x128xf32>
      %c0_19 = arith.constant 0 : index
      %c0_20 = arith.constant 0 : index
      %38 = vector.load %arg4[%c0_19, %c0_20] : memref<1x128xf32, #tpu.memory_space<vmem>>, vector<1x128xf32>
      tpu.vector_store %arg4[%c0_19, %c0_20], %37 {strides = array<i32>} : memref<1x128xf32, #tpu.memory_space<vmem>>, vector<1x128xf32>,
      %cst_21 = arith.constant 0.000000e+00 : f32
      %39 = vector.broadcast %cst_21 : f32 to vector<1x128xf32>
      %c0_22 = arith.constant 0 : index
      %c0_23 = arith.constant 0 : index
      %40 = vector.load %arg5[%c0_22, %c0_23] : memref<1x128xf32, #tpu.memory_space<vmem>>, vector<1x128xf32>
      tpu.vector_store %arg5[%c0_22, %c0_23], %39 {strides = array<i32>} : memref<1x128xf32, #tpu.memory_space<vmem>>, vector<1x128xf32>,
    } else {
    }
    %c0 = arith.constant 0 : index
    %c0_1 = arith.constant 0 : index
    %3 = vector.load %arg1[%c0, %c0_1] : memref<32x128xf32, #tpu.memory_space<vmem>>, vector<32x128xf32>
    %c0_2 = arith.constant 0 : index
    %c0_3 = arith.constant 0 : index
    %4 = vector.load %arg2[%c0_2, %c0_3] : memref<1x128xi32, #tpu.memory_space<vmem>>, vector<1x128xi32>
    %c255_i32 = arith.constant 255 : i32
    %5 = vector.broadcast %c255_i32 : i32 to vector<1x128xi32>
    %6 = arith.cmpi ne, %4, %5 : vector<1x128xi32>
    %cst = arith.constant dense<0xFF800000> : vector<128xf32>
    %7 = vector.multi_reduction <maximumf>, %3, %cst [0] : vector<32x128xf32> to vector<128xf32>
    %8 = vector.shape_cast %7 : vector<128xf32> to vector<1x128xf32>
    %9 = vector.broadcast %8 : vector<1x128xf32> to vector<32x128xf32>
    %10 = arith.subf %3, %9 : vector<32x128xf32>
    %11 = math.exp %10 : vector<32x128xf32>
    %cst_4 = arith.constant dense<0.000000e+00> : vector<128xf32>
    %12 = vector.multi_reduction <add>, %11, %cst_4 [0] : vector<32x128xf32> to vector<128xf32>
    %13 = vector.shape_cast %12 : vector<128xf32> to vector<1x128xf32>
    %14 = math.log %13 : vector<1x128xf32>
    %15 = arith.addf %8, %14 : vector<1x128xf32>
    %16 = tpu.iota {dimensions = array<i32: 0>} : vector<32x128xi32>
    %17 = vector.broadcast %4 : vector<1x128xi32> to vector<32x128xi32>
    %18 = arith.cmpi eq, %16, %17 : vector<32x128xi32>
    %cst_5 = arith.constant 0.000000e+00 : f32
    %19 = vector.broadcast %cst_5 : f32 to vector<32x128xf32>
    %20 = arith.select %18, %3, %19 : vector<32x128xi1>, vector<32x128xf32>
    %cst_6 = arith.constant dense<0.000000e+00> : vector<128xf32>
    %21 = vector.multi_reduction <add>, %20, %cst_6 [0] : vector<32x128xf32> to vector<128xf32>
    %22 = vector.shape_cast %21 : vector<128xf32> to vector<1x128xf32>
    %23 = arith.subf %15, %22 : vector<1x128xf32>
    %c0_7 = arith.constant 0 : index
    %c0_8 = arith.constant 0 : index
    %24 = vector.load %arg4[%c0_7, %c0_8] : memref<1x128xf32, #tpu.memory_space<vmem>>, vector<1x128xf32>
    %cst_9 = arith.constant 0.000000e+00 : f32
    %25 = vector.broadcast %cst_9 : f32 to vector<1x128xf32>
    %26 = arith.select %6, %23, %25 : vector<1x128xi1>, vector<1x128xf32>
    %27 = arith.addf %24, %26 : vector<1x128xf32>
    %c0_10 = arith.constant 0 : index
    %c0_11 = arith.constant 0 : index
    %28 = vector.load %arg4[%c0_10, %c0_11] : memref<1x128xf32, #tpu.memory_space<vmem>>, vector<1x128xf32>
    tpu.vector_store %arg4[%c0_10, %c0_11], %27 {strides = array<i32>} : memref<1x128xf32, #tpu.memory_space<vmem>>, vector<1x128xf32>,
    %c0_12 = arith.constant 0 : index
    %c0_13 = arith.constant 0 : index
    %29 = vector.load %arg5[%c0_12, %c0_13] : memref<1x128xf32, #tpu.memory_space<vmem>>, vector<1x128xf32>
    %30 = arith.extui %6 : vector<1x128xi1> to vector<1x128xi32>
    %31 = arith.sitofp %30 : vector<1x128xi32> to vector<1x128xf32>
    %32 = arith.addf %29, %31 : vector<1x128xf32>
    %c0_14 = arith.constant 0 : index
    %c0_15 = arith.constant 0 : index
    %33 = vector.load %arg5[%c0_14, %c0_15] : memref<1x128xf32, #tpu.memory_space<vmem>>, vector<1x128xf32>
    tpu.vector_store %arg5[%c0_14, %c0_15], %32 {strides = array<i32>} : memref<1x128xf32, #tpu.memory_space<vmem>>, vector<1x128xf32>,
    %c0_i32_16 = arith.constant 0 : i32
    %34 = arith.cmpi eq, %arg0, %c0_i32_16 : i32
    %35 = arith.extui %34 : i1 to i32
    %c0_i32_17 = arith.constant 0 : i32
    %36 = arith.cmpi ne, %35, %c0_i32_17 : i32
    scf.if %36 {
      %c0_18 = arith.constant 0 : index
      %c0_19 = arith.constant 0 : index
      %37 = vector.load %arg4[%c0_18, %c0_19] : memref<1x128xf32, #tpu.memory_space<vmem>>, vector<1x128xf32>
      %38 = vector.shape_cast %37 : vector<1x128xf32> to vector<1x1x128xf32>
      %cst_20 = arith.constant dense<0.000000e+00> : vector<1xf32>
      %39 = vector.multi_reduction <add>, %38, %cst_20 [1, 2] : vector<1x1x128xf32> to vector<1xf32>
      %40 = vector.shape_cast %39 : vector<1xf32> to vector<1x1x1xf32>
      %41 = vector.extract %40[0, 0, 0] : f32 from vector<1x1x1xf32>
      %42 = vector.broadcast %41 : f32 to vector<1x1xf32>
      %c0_21 = arith.constant 0 : index
      %c0_22 = arith.constant 0 : index
      %43 = vector.load %arg5[%c0_21, %c0_22] : memref<1x128xf32, #tpu.memory_space<vmem>>, vector<1x128xf32>
      %44 = vector.shape_cast %43 : vector<1x128xf32> to vector<1x1x128xf32>
      %cst_23 = arith.constant dense<0.000000e+00> : vector<1xf32>
      %45 = vector.multi_reduction <add>, %44, %cst_23 [1, 2] : vector<1x1x128xf32> to vector<1xf32>
      %46 = vector.shape_cast %45 : vector<1xf32> to vector<1x1x1xf32>
      %47 = vector.extract %46[0, 0, 0] : f32 from vector<1x1x1xf32>
      %48 = vector.broadcast %47 : f32 to vector<1x1xf32>
      %49 = arith.divf %42, %48 : vector<1x1xf32>
      %cst_24 = arith.constant 0.000000e+00 : f32
      %50 = vector.broadcast %cst_24 : f32 to vector<1x1xf32>
      %51 = arith.subf %50, %49 : vector<1x1xf32>
      %52 = math.exp %51 : vector<1x1xf32>
      %cst_25 = arith.constant 1.000000e+00 : f32
      %53 = vector.broadcast %cst_25 : f32 to vector<1x1xf32>
      %54 = arith.subf %53, %52 : vector<1x1xf32>
      %55 = arith.mulf %54, %54 : vector<1x1xf32>
      %cst_26 = arith.constant 0.000000e+00 : f32
      %56 = vector.broadcast %cst_26 : f32 to vector<1x1xf32>
      %57 = arith.subf %56, %55 : vector<1x1xf32>
      %cst_27 = arith.constant 2.500000e-01 : f32
      %58 = vector.broadcast %cst_27 : f32 to vector<1x1xf32>
      %59 = arith.mulf %58, %51 : vector<1x1xf32>
      %60 = arith.mulf %57, %59 : vector<1x1xf32>
      %cst_28 = arith.constant 2.000000e+00 : f32
      %61 = vector.broadcast %cst_28 : f32 to vector<1x1xf32>
      %62 = arith.divf %60, %61 : vector<1x1xf32>
      %cst_29 = arith.constant 1.000000e+00 : f32
      %63 = vector.broadcast %cst_29 : f32 to vector<1x1xf32>
      %64 = arith.mulf %63, %49 : vector<1x1xf32>
      %cst_30 = arith.constant 1.000000e+00 : f32
      %65 = vector.broadcast %cst_30 : f32 to vector<1x1xf32>
      %66 = arith.mulf %65, %62 : vector<1x1xf32>
      %67 = arith.addf %64, %66 : vector<1x1xf32>
      %c0_31 = arith.constant 0 : index
      %c0_32 = arith.constant 0 : index
      %68 = vector.load %arg3[%c0_31, %c0_32] : memref<1x1xf32, #tpu.memory_space<vmem>>, vector<1x1xf32>
      tpu.vector_store %arg3[%c0_31, %c0_32], %67 {strides = array<i32>} : memref<1x1xf32, #tpu.memory_space<vmem>>, vector<1x1xf32>,
    } else {
    }
    return
  }
  func.func @transform_0(%arg0: i32) -> (i32, i32) {
    %c0_i32 = arith.constant 0 : i32
    %c0_i32_0 = arith.constant 0 : i32
    return %c0_i32, %arg0 : i32, i32
  }
  func.func @transform_1(%arg0: i32) -> (i32, i32) {
    %c0_i32 = arith.constant 0 : i32
    %c0_i32_0 = arith.constant 0 : i32
    return %c0_i32, %arg0 : i32, i32
  }
  func.func @transform_2(%arg0: i32) -> (i32, i32) {
    %c0_i32 = arith.constant 0 : i32
    %c0_i32_0 = arith.constant 0 : i32
    %c0_i32_1 = arith.constant 0 : i32
    return %c0_i32, %c0_i32_0 : i32, i32
  }
}

</mosaic_0001>

<llo_original>
// kernel: tpu_custom_call.1
$region0: #{tpu_custom_call.1}
  #allocation0 [shape = 'u32[]', space=smem, size = 0x4, offset = 0x4, fixed_abs, tag = 'smem constant byte address 0x4 - core index']
  #allocation1 [shape = 'u32[144,128]{1,0:T(1,128)}', space=vmem, size = 0x12000, scoped, tag = 'internal scratch']
  #allocation2 [shape = 'f32[1,128]{1,0:T(1,128)}', space=vmem, size = 0x200, scoped, tag = 'scratch operand']
  #allocation3 [shape = 'f32[1,128]{1,0:T(1,128)}', space=vmem, size = 0x200, scoped, tag = 'scratch operand']
  %s0 = inlined_call_operand.hbm [shape: f32[32,128], index: 0, kind: input, shape index: {}]
  %s1 = inlined_call_operand.vmem [shape: s32[1,128], index: 1, kind: input, shape index: {}]
  %s2 = inlined_call_operand.hbm [shape: f32[1,1], index: 2, kind: output, shape index: {}]
  %s3 = sld [smem:[#allocation0]]
  $region30: #{tpu_custom_call.1} parent=0
    _
  %s5 = ssub.s32 1, %s3
  %s6 = scalar_select 0, %s5, %s3
  $region1: #{tpu_custom_call.1} parent=0
    #allocation4 [shape = 'u8[16384]{0}', space=vmem, size = 0x4000, scoped, tag = 'input window, operand 0, single buffered']
    #allocation5 [shape = 's32[1]{0}', space=sflag, size = 0x4, scoped, tag = 'scoped memory for tpu_custom_call.1']
    #allocation6 [shape = 's32[1]{0}', space=sflag, size = 0x4, scoped, tag = 'scoped memory for tpu_custom_call.1']
    #allocation7 [shape = 'u8[512]{0}', space=vmem, size = 0x400, scoped, tag = 'output window, operand 0, single buffered']
    %7 = vsyncpa [#allocation5], 0
    %8 = vsyncpa [#allocation6], 0
    // Predicated region
    $region2: #{tpu_custom_call.1} parent=1 // pred_check
      _
    $region3: #{tpu_custom_call.1} parent=1 // pred_check_branch
      %10 = sbr.rel (0) target = $region5
    $region4: #{tpu_custom_call.1} parent=1 // pred_region
      %s12 = ssub.s32 512, 512
      %13 = vsyncadd [#allocation5], %s12
      %s14 = sshll.u32 [#allocation4], 4
      %s15 = int_to_ptr.vmem [resolvable:$true] %s14
      %20 = dma.hbm_to_vmem [thread:$0]  %s0, 512, %s15, [#allocation5], 128, 128, 8
    $region5: #{tpu_custom_call.1} parent=1 // pred_fallthru
      _
    // Predicated region
    $region6: #{tpu_custom_call.1} parent=1 // pred_check
      _
    $region7: #{tpu_custom_call.1} parent=1 // pred_check_branch
      %22 = sbr.rel (0) target = $region9
    $region8: #{tpu_custom_call.1} parent=1 // pred_region
      _
    $region9: #{tpu_custom_call.1} parent=1 // pred_fallthru
      _
    // Predicated region
    $region10: #{tpu_custom_call.1} parent=1 // pred_check
      _
    $region11: #{tpu_custom_call.1} parent=1 // pred_check_branch
      %24 = sbr.rel (0) target = $region13
    $region12: #{tpu_custom_call.1} parent=1 // pred_region
      %25 = dma.done [#allocation5], 512
    $region13: #{tpu_custom_call.1} parent=1 // pred_fallthru
      _
    %p26 = scmp.eq.s32.totalorder 0, 0
    // Predicated region
    $region14: #{tpu_custom_call.1} parent=1 // pred_check
      %p27 = pneg %p26
    $region15: #{tpu_custom_call.1} parent=1 // pred_check_branch
      %29 = sbr.rel (%p27) target = $region17
    $region16: #{tpu_custom_call.1} parent=1 // pred_region
      %30 = vst [vmem:[#allocation2] sm:$0x1] 0.0
      %31 = vst [vmem:[#allocation3] sm:$0x1] 0.0
    $region17: #{tpu_custom_call.1} parent=1 // pred_fallthru
      _
    %v32 = vld [vmem:[#allocation4] sm:$0xff]
    %v33 = vld [vmem:[#allocation4 + $0x8] sm:$0xff]
    %v34 = vld [vmem:[#allocation4 + $0x10] sm:$0xff]
    %v35 = vld [vmem:[#allocation4 + $0x18] sm:$0xff]
    %v36 = vld [vmem:[%s1] sm:$0x1]
    %vm37 = vcmp.ne.s32.totalorder %v36, 255
    %v38 = vmax.f32 %v32, %v33
    %v39 = vmax.f32 %v34, %v35
    %v40 = vmax.f32 %v38, %v39
    %v41 = vrot.slane %v40, 4
    %v42 = vmax.f32 %v40, %v41
    %v43 = vrot.slane %v42, 2
    %v44 = vmax.f32 %v42, %v43
    %v45 = vrot.slane %v44, 1
    %v46 = vmax.f32 %v44, %v45
    %v47 = vsub.f32 %v32, %v46
    %v48 = vsub.f32 %v33, %v46
    %v49 = vsub.f32 %v34, %v46
    %v50 = vsub.f32 %v35, %v46
    %v51 = vmul.f32 %v47, 1.442695
    %v52 = vpow.pop %v51
    %v53 = vmul.f32 %v48, 1.442695
    %v54 = vpow.pop %v53
    %v55 = vmul.f32 %v49, 1.442695
    %v56 = vpow.pop %v55
    %v57 = vmul.f32 %v50, 1.442695
    %v58 = vpow.pop %v57
    %v59 = vadd.f32 %v52, %v54
    %v60 = vadd.f32 %v59, %v56
    %v61 = vadd.f32 %v60, %v58
    %v62 = vrot.slane %v61, 4
    %v63 = vadd.f32 %v61, %v62
    %v64 = vrot.slane %v63, 2
    %v65 = vadd.f32 %v63, %v64
    %v66 = vrot.slane %v65, 1
    %v67 = vadd.f32 %v65, %v66
    %v68 = vlog2.pop %v67
    %v69 = vmul.f32 %v68, 0.6931472
    %v70 = vadd.f32 %v46, %v69
    %v71 = vlaneseq
    %v72 = vshrl.u32 %v71, 7
    %v73 = vadd.s32 %v72, 8
    %v74 = vadd.s32 %v72, 16
    %v75 = vadd.s32 %v72, 24
    %v76 = vlaneseq
    %v77 = vshrl.u32 %v76, 7
    %v78 = vsub.s32 0, %v77
    %v79 = vrot.slane %v36, %v78
    %vm80 = vcmp.eq.s32.totalorder %v72, %v79
    %vm81 = vcmp.eq.s32.totalorder %v73, %v79
    %vm82 = vcmp.eq.s32.totalorder %v74, %v79
    %vm83 = vcmp.eq.s32.totalorder %v75, %v79
    %v84 = vsel %vm80, %v32, 0.0
    %v85 = vsel %vm81, %v33, 0.0
    %v86 = vsel %vm82, %v34, 0.0
    %v87 = vsel %vm83, %v35, 0.0
    %v88 = vadd.f32 %v84, %v85
    %v89 = vadd.f32 %v88, %v86
    %v90 = vadd.f32 %v89, %v87
    %v91 = vrot.slane %v90, 4
    %v92 = vadd.f32 %v90, %v91
    %v93 = vrot.slane %v92, 2
    %v94 = vadd.f32 %v92, %v93
    %v95 = vrot.slane %v94, 1
    %v96 = vadd.f32 %v94, %v95
    %v97 = vsub.f32 %v70, %v96
    %v98 = vld [vmem:[#allocation2] sm:$0x1]
    %v99 = vsel %vm37, %v97, 0.0
    %v100 = vadd.f32 %v98, %v99
    %101 = vst [vmem:[#allocation2] sm:$0x1] %v100
    %v102 = vld [vmem:[#allocation3] sm:$0x1]
    %v103 = vsel %vm37, 1, 0
    %v104 = vcvt.s32.f32 %v103
    %v105 = vadd.f32 %v102, %v104
    %106 = vst [vmem:[#allocation3] sm:$0x1] %v105
    // Predicated region
    $region18: #{tpu_custom_call.1} parent=1 // pred_check
      %p107 = pneg %p26
    $region19: #{tpu_custom_call.1} parent=1 // pred_check_branch
      %109 = sbr.rel (%p107) target = $region21
    $region20: #{tpu_custom_call.1} parent=1 // pred_region
      %v110 = vld [vmem:[#allocation2] sm:$0x1]
      %vm111 = vcmask 1040384
      %v112 = vsel %vm111, %v110, 0.0
      %113 = vadd.xlane.f32.xlu0 %v112
      %v114 = vpop.xlane.xlu0 %113
      %v115 = vrot.slane %v114, 4
      %v116 = vadd.f32 %v114, %v115
      %v117 = vrot.slane %v116, 2
      %v118 = vadd.f32 %v116, %v117
      %v119 = vrot.slane %v118, 1
      %v120 = vadd.f32 %v118, %v119
      %s121 = vtos %v120
      %v122 = vstv %s121
      %v123 = vld [vmem:[#allocation3] sm:$0x1]
      %v124 = vsel %vm111, %v123, 0.0
      %125 = vadd.xlane.f32.xlu0 %v124
      %v126 = vpop.xlane.xlu0 %125
      %v127 = vrot.slane %v126, 4
      %v128 = vadd.f32 %v126, %v127
      %v129 = vrot.slane %v128, 2
      %v130 = vadd.f32 %v128, %v129
      %v131 = vrot.slane %v130, 1
      %v132 = vadd.f32 %v130, %v131
      %s133 = vtos %v132
      %v134 = vstv %s133
      %v135 = vrcp.pop %v134
      %v136 = vmul.f32 %v122, %v135
      %v137 = vsub.f32 0.0, %v136
      %v138 = vmul.f32 %v137, 1.442695
      %v139 = vpow.pop %v138
      %v140 = vsub.f32 1.0, %v139
      %v141 = vmul.f32 %v140, %v140
      %v142 = vsub.f32 0.0, %v141
      %v143 = vmul.f32 %v137, 0.25
      %v144 = vmul.f32 %v142, %v143
      %v145 = vrcp.pop 2.0
      %v146 = vmul.f32 %v144, %v145
      %v147 = vadd.f32 %v136, %v146
      %vm148 = vcmask 0
      %149 = vst.msk [vmem:[#allocation7] sm:$0x1] %vm148, %v147
    $region21: #{tpu_custom_call.1} parent=1 // pred_fallthru
      _
    // Predicated region
    $region22: #{tpu_custom_call.1} parent=1 // pred_check
      _
    $region23: #{tpu_custom_call.1} parent=1 // pred_check_branch
      %151 = sbr.rel (0) target = $region25
    $region24: #{tpu_custom_call.1} parent=1 // pred_region
      %s153 = ssub.s32 16, 16
      %154 = vsyncadd [#allocation6], %s153
      %s156 = sshll.u32 [#allocation7], 4
      %s157 = int_to_ptr.vmem [resolvable:$true] %s156
      %159 = dma.vmem_to_hbm [thread:$0]  %s157, 16, %s2, [#allocation6]
    $region25: #{tpu_custom_call.1} parent=1 // pred_fallthru
      _
    // Predicated region
    $region26: #{tpu_custom_call.1} parent=1 // pred_check
      _
    $region27: #{tpu_custom_call.1} parent=1 // pred_check_branch
      %161 = sbr.rel (0) target = $region29
    $region28: #{tpu_custom_call.1} parent=1 // pred_region
      %162 = dma.done [#allocation6], 16
    $region29: #{tpu_custom_call.1} parent=1 // pred_fallthru
      _
    %163 = vsyncpa [#allocation5], 1
    %164 = vsyncpa [#allocation6], 1

</llo_original>
